<compile_context>
chip_gen: v6e
topology: v6e:2x2x1
jax: 0.10.0
libtpu: 0.0.40
codegen_flags: <defaults>
</compile_context>

<pallas_src>
import functools

import jax
import jax.numpy as jnp
from jax.experimental import pallas as pl
from jax.experimental.pallas import tpu as pltpu


def _t2v_kernel(n_freq, x_ref, w_ref, b_ref, o_ref):
    # x_ref: (tm, F*G)    folded row tile (G original rows per folded row)
    # w_ref: (F*G, nf*G)  block-diagonal fused weight
    # b_ref: (1,  nf*G)   tiled fused bias
    # o_ref: (tm, nf*G)   output tile (last dim multiple of 128 -> unmasked vst)
    y = jnp.dot(x_ref[...], w_ref[...], preferred_element_type=jnp.float32)
    y = y + b_ref[...]
    ow = y.shape[-1]
    # Column j of each folded n_freq-wide group: j % n_freq == 0 is the
    # non-periodic (linear) column; all others get sin().
    col = jax.lax.broadcasted_iota(jnp.int32, (1, ow), 1)
    is_linear = (col % n_freq) == 0
    o_ref[...] = jnp.where(is_linear, y, jnp.sin(y)).astype(o_ref.dtype)


def _round_up(v, m):
    return ((v + m - 1) // m) * m


def _pick_fold(rows):
    """Pick row-fold factor G (>= 2 so the output stays lane-dense) and the
    (possibly padded) row count it applies to."""
    for g in (32, 16, 8, 4, 2):
        if rows % g == 0:
            return g, rows
    # Odd row count: pad by a few 12-byte rows instead of dropping to G=1
    # (G=1 -> ow = n_freq = 64 < 128 lanes -> masked half-vreg stores).
    return 8, _round_up(rows, 8)


def _vmem_bytes(tm, fw, ow, out_itemsize):
    """Rough double-buffered VMEM footprint of one pipeline stage."""
    lane, sub = 128, 8
    in_b = 2 * tm * _round_up(fw, lane) * 4
    out_b = 2 * tm * ow * out_itemsize
    w_b = 2 * _round_up(fw, sub) * ow * 4
    b_b = 2 * sub * ow * 4
    return in_b + out_b + w_b + b_b


def t2v_forward(x, w_fused, b_fused, *, rows_per_tile=16384, out_dtype=None,
                vmem_budget_bytes=14 * 1024 * 1024):
    """x: (N, T, F) float32, w_fused: (F, n_freq), b_fused: (n_freq,)."""
    N, T, F = x.shape
    n_freq = w_fused.shape[1]
    out_dtype = x.dtype if out_dtype is None else out_dtype
    rows = N * T

    G, rows_pad = _pick_fold(rows)
    fr = rows_pad // G                    # folded rows
    fw = F * G                            # folded input width
    ow = n_freq * G                       # folded output width (multiple of 128)

    # Block-diagonal fused weight / tiled bias.
    w_big = jnp.kron(jnp.eye(G, dtype=w_fused.dtype), w_fused)     # (fw, ow)
    b_big = jnp.tile(b_fused, G).reshape(1, ow)                    # (1, ow)

    # Free row-major reshape (plus a tiny pad only when rows is odd).
    x2 = x.reshape(rows, F)
    if rows_pad != rows:
        x2 = jnp.pad(x2, ((0, rows_pad - rows), (0, 0)))
    x2 = x2.reshape(fr, fw)

    # Row tile: big enough to amortize the ~0.35 us/step pipeline overhead,
    # small enough to (a) leave >= 2 grid steps for megacore sharding on v7x
    # and (b) keep the double-buffered footprint under the scoped-VMEM budget.
    if fr >= 16:
        tm_cap = max(8, (rows_per_tile // G) // 8 * 8)
        half = _round_up(pl.cdiv(fr, 2), 8)          # guarantees >= 2 steps
        tm_eff = min(tm_cap, half)
        while (_vmem_bytes(tm_eff, fw, ow, jnp.dtype(out_dtype).itemsize)
               > vmem_budget_bytes and tm_eff > 8):
            tm_eff = max(8, (tm_eff // 2) // 8 * 8)
    else:
        tm_eff = fr                                  # single full-dim block

    grid = (pl.cdiv(fr, tm_eff),)                    # partial last block is OK

    out = pl.pallas_call(
        functools.partial(_t2v_kernel, n_freq),
        out_shape=jax.ShapeDtypeStruct((fr, ow), out_dtype),
        grid_spec=pltpu.PrefetchScalarGridSpec(
            num_scalar_prefetch=0,
            grid=grid,
            in_specs=[
                pl.BlockSpec((tm_eff, fw), lambda i: (i, 0)),
                pl.BlockSpec((fw, ow), lambda i: (0, 0)),
                pl.BlockSpec((1, ow), lambda i: (0, 0)),
            ],
            out_specs=pl.BlockSpec((tm_eff, ow), lambda i: (i, 0)),
        ),
        compiler_params=pltpu.CompilerParams(
            dimension_semantics=("parallel",)),
    )(x2, w_big, b_big)

    # Unfold: each folded row holds G contiguous (n_freq)-wide outputs.
    out = out.reshape(rows_pad, n_freq)
    if rows_pad != rows:
        out = out[:rows]
    return out.reshape(N, T, n_freq)


def init_t2v_params(key, input_dim=3, n_frequencies=64):
    """Deterministic init matching the PyTorch module's parameter shapes.

    nn.Linear(input_dim, 1)          -> w_np (1, F),        b_np (1,)
    nn.Linear(input_dim, n_freq - 1) -> w_p  (n_freq-1, F), b_p  (n_freq-1,)
    Fused into W (F, n_freq), b (n_freq,) with column 0 = non-periodic.
    """
    k1, k2, k3, k4 = jax.random.split(key, 4)
    bound = 1.0 / jnp.sqrt(input_dim)
    w_np = jax.random.uniform(k1, (1, input_dim), jnp.float32, -bound, bound)
    b_np = jax.random.uniform(k2, (1,), jnp.float32, -bound, bound)
    w_p = jax.random.uniform(k3, (n_frequencies - 1, input_dim),
                             jnp.float32, -bound, bound)
    b_p = jax.random.uniform(k4, (n_frequencies - 1,),
                             jnp.float32, -bound, bound)
    w_fused = jnp.concatenate([w_np, w_p], axis=0).T      # (F, n_freq)
    b_fused = jnp.concatenate([b_np, b_p], axis=0)        # (n_freq,)
    return w_fused, b_fused


def t2v_reference(x, w_fused, b_fused):
    """Pure-JAX reference for correctness check."""
    y = x @ w_fused + b_fused
    return jnp.concatenate([y[..., :1], jnp.sin(y[..., 1:])], axis=-1)


if __name__ == "__main__":
    key = jax.random.PRNGKey(0)
    kx, kp = jax.random.split(key)

    F = 3                       # year / month / day features
    n_freq = 64
    w_fused, b_fused = init_t2v_params(kp, input_dim=F, n_frequencies=n_freq)

    # (N, T) cases: base shape, odd rows (pad path), G=2 path, multi-step grid
    # with a partial last block (rows=800 -> G=32, fr=25, 2 grid steps).
    cases = [(2, 8), (3, 7), (2, 5), (8, 100)]
    ok = True
    for n, t in cases:
        xk = jax.random.fold_in(kx, n * 1000 + t)
        x = jax.random.normal(xk, (n, t, F), dtype=jnp.float32)
        out = jax.block_until_ready(t2v_forward(x, w_fused, b_fused))
        ref = t2v_reference(x, w_fused, b_fused)
        if out.shape != (n, t, n_freq):
            ok = False
            print("shape mismatch", (n, t), out.shape)
        elif not jnp.allclose(out, ref, atol=1e-5, rtol=1e-5):
            ok = False
            print("value mismatch", (n, t),
                  float(jnp.max(jnp.abs(out - ref))))

    if ok:
        print("KERNEL_OK")
</pallas_src>

<mosaic_0001>
module attributes {stable_mosaic.version = 11 : i64} {
  func.func @_t2v_kernel(%arg0: i32, %arg1: memref<1x48xf32, #tpu.memory_space<vmem>>, %arg2: memref<48x1024xf32, #tpu.memory_space<vmem>>, %arg3: memref<1x1024xf32, #tpu.memory_space<vmem>>, %arg4: memref<1x1024xf32, #tpu.memory_space<vmem>>) attributes {dimension_semantics = [#tpu.dimension_semantics<parallel>], iteration_bounds = array<i64: 1>, scalar_prefetch = 0 : i64, scratch_operands = 0 : i64, tpu.core_type = #tpu.core_type<tc>, window_params = [{transform_indices = @transform_0, window_bounds = array<i64: 1, 48>}, {pipeline_mode = #tpu.pipeline_mode<synchronous>, transform_indices = @transform_1, window_bounds = array<i64: 48, 1024>}, {pipeline_mode = #tpu.pipeline_mode<synchronous>, transform_indices = @transform_2, window_bounds = array<i64: 1, 1024>}, {transform_indices = @transform_3, window_bounds = array<i64: 1, 1024>}]} {
    %c0 = arith.constant 0 : index
    %c0_0 = arith.constant 0 : index
    %0 = vector.load %arg1[%c0, %c0_0] : memref<1x48xf32, #tpu.memory_space<vmem>>, vector<1x48xf32>
    %c0_1 = arith.constant 0 : index
    %c0_2 = arith.constant 0 : index
    %1 = vector.load %arg2[%c0_1, %c0_2] : memref<48x1024xf32, #tpu.memory_space<vmem>>, vector<48x1024xf32>
    %cst = arith.constant dense<0.000000e+00> : vector<1x1024xf32>
    %2 = tpu.matmul %0, %1, %cst {dimension_numbers = #tpu.dot_dimension_numbers<[1], [0], [0], [1], [0, 0, 1, 1], [], []>} : vector<1x48xf32>, vector<48x1024xf32>, vector<1x1024xf32> -> vector<1x1024xf32>
    %c0_3 = arith.constant 0 : index
    %c0_4 = arith.constant 0 : index
    %3 = vector.load %arg3[%c0_3, %c0_4] : memref<1x1024xf32, #tpu.memory_space<vmem>>, vector<1x1024xf32>
    %4 = arith.addf %2, %3 : vector<1x1024xf32>
    %5 = tpu.iota {dimensions = array<i32: 1>} : vector<1x1024xi32>
    %c64_i32 = arith.constant 64 : i32
    %c0_i32 = arith.constant 0 : i32
    %6 = arith.cmpi eq, %c64_i32, %c0_i32 : i32
    %c1_i32 = arith.constant 1 : i32
    %7 = arith.select %6, %c1_i32, %c64_i32 : i32
    %8 = vector.broadcast %7 : i32 to vector<1x1024xi32>
    %9 = arith.remsi %5, %8 : vector<1x1024xi32>
    %c0_i32_5 = arith.constant 0 : i32
    %10 = vector.broadcast %c0_i32_5 : i32 to vector<1x1024xi32>
    %11 = arith.cmpi ne, %9, %10 : vector<1x1024xi32>
    %c0_i32_6 = arith.constant 0 : i32
    %12 = vector.broadcast %c0_i32_6 : i32 to vector<1x1024xi32>
    %13 = arith.cmpi slt, %9, %12 : vector<1x1024xi32>
    %c0_i32_7 = arith.constant 0 : i32
    %14 = arith.cmpi slt, %7, %c0_i32_7 : i32
    %15 = vector.broadcast %14 : i1 to vector<1x1024xi1>
    %16 = vector.broadcast %15 : vector<1x1024xi1> to vector<1x1024xi1>
    %17 = arith.xori %13, %16 : vector<1x1024xi1>
    %18 = arith.andi %17, %11 : vector<1x1024xi1>
    %19 = vector.broadcast %7 : i32 to vector<1x1024xi32>
    %20 = arith.addi %9, %19 : vector<1x1024xi32>
    %21 = arith.select %18, %20, %9 : vector<1x1024xi1>, vector<1x1024xi32>
    %c0_i32_8 = arith.constant 0 : i32
    %22 = vector.broadcast %c0_i32_8 : i32 to vector<1x1024xi32>
    %23 = arith.cmpi eq, %21, %22 : vector<1x1024xi32>
    %24 = math.sin %4 : vector<1x1024xf32>
    %25 = arith.select %23, %4, %24 : vector<1x1024xi1>, vector<1x1024xf32>
    %c0_9 = arith.constant 0 : index
    %c0_10 = arith.constant 0 : index
    %26 = vector.load %arg4[%c0_9, %c0_10] : memref<1x1024xf32, #tpu.memory_space<vmem>>, vector<1x1024xf32>
    tpu.vector_store %arg4[%c0_9, %c0_10], %25 {strides = array<i32>} : memref<1x1024xf32, #tpu.memory_space<vmem>>, vector<1x1024xf32>,
    return
  }
  func.func @transform_0(%arg0: i32) -> (i32, i32) {
    %c0_i32 = arith.constant 0 : i32
    %c0_i32_0 = arith.constant 0 : i32
    return %arg0, %c0_i32 : i32, i32
  }
  func.func @transform_1(%arg0: i32) -> (i32, i32) {
    %c0_i32 = arith.constant 0 : i32
    %c0_i32_0 = arith.constant 0 : i32
    %c0_i32_1 = arith.constant 0 : i32
    return %c0_i32, %c0_i32_0 : i32, i32
  }
  func.func @transform_2(%arg0: i32) -> (i32, i32) {
    %c0_i32 = arith.constant 0 : i32
    %c0_i32_0 = arith.constant 0 : i32
    %c0_i32_1 = arith.constant 0 : i32
    return %c0_i32, %c0_i32_0 : i32, i32
  }
  func.func @transform_3(%arg0: i32) -> (i32, i32) {
    %c0_i32 = arith.constant 0 : i32
    %c0_i32_0 = arith.constant 0 : i32
    return %arg0, %c0_i32 : i32, i32
  }
}

</mosaic_0001>

<llo_original>
// kernel: tpu_custom_call.1
$region0: #{tpu_custom_call.1}
  #allocation0 [shape = 'u32[]', space=smem, size = 0x4, offset = 0x4, fixed_abs, tag = 'smem constant byte address 0x4 - core index']
  #allocation1 [shape = 'u32[144,128]{1,0:T(1,128)}', space=vmem, size = 0x12000, scoped, tag = 'internal scratch']
  %s0 = inlined_call_operand.hbm [shape: f32[1,48], index: 0, kind: input, shape index: {}]
  %s1 = inlined_call_operand.hbm [shape: f32[48,1024], index: 1, kind: input, shape index: {}]
  %s2 = inlined_call_operand.hbm [shape: f32[1,1024], index: 2, kind: input, shape index: {}]
  %s3 = inlined_call_operand.hbm [shape: f32[1,1024], index: 3, kind: output, shape index: {}]
  %s4 = sld [smem:[#allocation0]]
  $region34: #{tpu_custom_call.1} parent=0
    _
  %s6 = ssub.s32 1, %s4
  %s7 = scalar_select 0, %s6, %s4
  $region1: #{tpu_custom_call.1} parent=0
    #allocation2 [shape = 'u8[512]{0}', space=vmem, size = 0x400, scoped, tag = 'input window, operand 0, single buffered']
    #allocation3 [shape = 's32[1]{0}', space=sflag, size = 0x4, scoped, tag = 'scoped memory for tpu_custom_call.1']
    #allocation4 [shape = 's32[1]{0}', space=sflag, size = 0x4, scoped, tag = 'scoped memory for tpu_custom_call.1']
    #allocation5 [shape = 'u8[196608]{0}', space=vmem, size = 0x30000, scoped, tag = 'input window, operand 1, single buffered']
    #allocation6 [shape = 's32[1]{0}', space=sflag, size = 0x4, scoped, tag = 'scoped memory for tpu_custom_call.1']
    #allocation7 [shape = 'u8[4096]{0}', space=vmem, size = 0x1000, scoped, tag = 'input window, operand 2, single buffered']
    #allocation8 [shape = 'u8[4096]{0}', space=vmem, size = 0x1000, scoped, tag = 'output window, operand 0, single buffered']
    %8 = vsyncpa [#allocation3], 0
    %9 = vsyncpa [#allocation6], 0
    %10 = vsyncpa [#allocation4], 0
    // Predicated region
    $region2: #{tpu_custom_call.1} parent=1 // pred_check
      _
    $region3: #{tpu_custom_call.1} parent=1 // pred_check_branch
      %12 = sbr.rel (0) target = $region5
    $region4: #{tpu_custom_call.1} parent=1 // pred_region
      %s14 = ssub.s32 16, 16
      %15 = vsyncadd [#allocation3], %s14
      %s17 = sshll.u32 [#allocation2], 4
      %s18 = int_to_ptr.vmem [resolvable:$true] %s17
      %20 = dma.hbm_to_vmem [thread:$0]  %s0, 16, %s18, [#allocation3]
    $region5: #{tpu_custom_call.1} parent=1 // pred_fallthru
      _
    // Predicated region
    $region6: #{tpu_custom_call.1} parent=1 // pred_check
      _
    $region7: #{tpu_custom_call.1} parent=1 // pred_check_branch
      %22 = sbr.rel (0) target = $region9
    $region8: #{tpu_custom_call.1} parent=1 // pred_region
      %s24 = ssub.s32 6144, 6144
      %25 = vsyncadd [#allocation6], %s24
      %s26 = sshll.u32 [#allocation5], 4
      %s27 = int_to_ptr.vmem [resolvable:$true] %s26
      %32 = dma.hbm_to_vmem [thread:$0]  %s1, 6144, %s27, [#allocation6], 1024, 1024, 64
    $region9: #{tpu_custom_call.1} parent=1 // pred_fallthru
      _
    // Predicated region
    $region10: #{tpu_custom_call.1} parent=1 // pred_check
      _
    $region11: #{tpu_custom_call.1} parent=1 // pred_check_branch
      %34 = sbr.rel (0) target = $region13
    $region12: #{tpu_custom_call.1} parent=1 // pred_region
      %s36 = ssub.s32 128, 128
      %37 = vsyncadd [#allocation6], %s36
      %s39 = sshll.u32 [#allocation7], 4
      %s40 = int_to_ptr.vmem [resolvable:$true] %s39
      %42 = dma.hbm_to_vmem [thread:$0]  %s2, 128, %s40, [#allocation6]
    $region13: #{tpu_custom_call.1} parent=1 // pred_fallthru
      _
    // Predicated region
    $region14: #{tpu_custom_call.1} parent=1 // pred_check
      _
    $region15: #{tpu_custom_call.1} parent=1 // pred_check_branch
      %44 = sbr.rel (0) target = $region17
    $region16: #{tpu_custom_call.1} parent=1 // pred_region
      %45 = dma.done [#allocation3], 16
    $region17: #{tpu_custom_call.1} parent=1 // pred_fallthru
      _
    // Predicated region
    $region18: #{tpu_custom_call.1} parent=1 // pred_check
      _
    $region19: #{tpu_custom_call.1} parent=1 // pred_check_branch
      %47 = sbr.rel (0) target = $region21
    $region20: #{tpu_custom_call.1} parent=1 // pred_region
      %48 = dma.done [#allocation6], 6144
    $region21: #{tpu_custom_call.1} parent=1 // pred_fallthru
      _
    // Predicated region
    $region22: #{tpu_custom_call.1} parent=1 // pred_check
      _
    $region23: #{tpu_custom_call.1} parent=1 // pred_check_branch
      %50 = sbr.rel (0) target = $region25
    $region24: #{tpu_custom_call.1} parent=1 // pred_region
      %51 = dma.done [#allocation6], 128
    $region25: #{tpu_custom_call.1} parent=1 // pred_fallthru
      _
    %v52 = vld [vmem:[#allocation2] sm:$0x1]
    %v53 = vld [vmem:[#allocation5] sm:$0xff]
    %v54 = vld [vmem:[#allocation5 + $0x8] sm:$0xff]
    %v55 = vld [vmem:[#allocation5 + $0x10] sm:$0xff]
    %v56 = vld [vmem:[#allocation5 + $0x18] sm:$0xff]
    %v57 = vld [vmem:[#allocation5 + $0x20] sm:$0xff]
    %v58 = vld [vmem:[#allocation5 + $0x28] sm:$0xff]
    %v59 = vld [vmem:[#allocation5 + $0x30] sm:$0xff]
    %v60 = vld [vmem:[#allocation5 + $0x38] sm:$0xff]
    %v61 = vld [vmem:[#allocation5 + $0x40] sm:$0xff]
    %v62 = vld [vmem:[#allocation5 + $0x48] sm:$0xff]
    %v63 = vld [vmem:[#allocation5 + $0x50] sm:$0xff]
    %v64 = vld [vmem:[#allocation5 + $0x58] sm:$0xff]
    %v65 = vld [vmem:[#allocation5 + $0x60] sm:$0xff]
    %v66 = vld [vmem:[#allocation5 + $0x68] sm:$0xff]
    %v67 = vld [vmem:[#allocation5 + $0x70] sm:$0xff]
    %v68 = vld [vmem:[#allocation5 + $0x78] sm:$0xff]
    %v69 = vld [vmem:[#allocation5 + $0x80] sm:$0xff]
    %v70 = vld [vmem:[#allocation5 + $0x88] sm:$0xff]
    %v71 = vld [vmem:[#allocation5 + $0x90] sm:$0xff]
    %v72 = vld [vmem:[#allocation5 + $0x98] sm:$0xff]
    %v73 = vld [vmem:[#allocation5 + $0xa0] sm:$0xff]
    %v74 = vld [vmem:[#allocation5 + $0xa8] sm:$0xff]
    %v75 = vld [vmem:[#allocation5 + $0xb0] sm:$0xff]
    %v76 = vld [vmem:[#allocation5 + $0xb8] sm:$0xff]
    %v77 = vld [vmem:[#allocation5 + $0xc0] sm:$0xff]
    %v78 = vld [vmem:[#allocation5 + $0xc8] sm:$0xff]
    %v79 = vld [vmem:[#allocation5 + $0xd0] sm:$0xff]
    %v80 = vld [vmem:[#allocation5 + $0xd8] sm:$0xff]
    %v81 = vld [vmem:[#allocation5 + $0xe0] sm:$0xff]
    %v82 = vld [vmem:[#allocation5 + $0xe8] sm:$0xff]
    %v83 = vld [vmem:[#allocation5 + $0xf0] sm:$0xff]
    %v84 = vld [vmem:[#allocation5 + $0xf8] sm:$0xff]
    %v85 = vld [vmem:[#allocation5 + $0x100] sm:$0xff]
    %v86 = vld [vmem:[#allocation5 + $0x108] sm:$0xff]
    %v87 = vld [vmem:[#allocation5 + $0x110] sm:$0xff]
    %v88 = vld [vmem:[#allocation5 + $0x118] sm:$0xff]
    %v89 = vld [vmem:[#allocation5 + $0x120] sm:$0xff]
    %v90 = vld [vmem:[#allocation5 + $0x128] sm:$0xff]
    %v91 = vld [vmem:[#allocation5 + $0x130] sm:$0xff]
    %v92 = vld [vmem:[#allocation5 + $0x138] sm:$0xff]
    %v93 = vld [vmem:[#allocation5 + $0x140] sm:$0xff]
    %v94 = vld [vmem:[#allocation5 + $0x148] sm:$0xff]
    %v95 = vld [vmem:[#allocation5 + $0x150] sm:$0xff]
    %v96 = vld [vmem:[#allocation5 + $0x158] sm:$0xff]
    %v97 = vld [vmem:[#allocation5 + $0x160] sm:$0xff]
    %v98 = vld [vmem:[#allocation5 + $0x168] sm:$0xff]
    %v99 = vld [vmem:[#allocation5 + $0x170] sm:$0xff]
    %v100 = vld [vmem:[#allocation5 + $0x178] sm:$0xff]
    %v101 = vld [vmem:[#allocation7] sm:$0xff]
    %v103 = vlaneseq
    %v104 = vshrl.u32 %v103, 7
    %v105 = vsub.s32 0, %v104
    %v106 = vrot.slane %v101, %v105
    %v107 = vlaneseq
    %v108 = vshrl.u32 %v107, 7
    %v109 = vsub.s32 1, %v108
    %v110 = vrot.slane %v101, %v109
    %v111 = vlaneseq
    %v112 = vshrl.u32 %v111, 7
    %v113 = vsub.s32 2, %v112
    %v114 = vrot.slane %v101, %v113
    %v115 = vlaneseq
    %v116 = vshrl.u32 %v115, 7
    %v117 = vsub.s32 3, %v116
    %v118 = vrot.slane %v101, %v117
    %v119 = vlaneseq
    %v120 = vshrl.u32 %v119, 7
    %v121 = vsub.s32 4, %v120
    %v122 = vrot.slane %v101, %v121
    %v123 = vlaneseq
    %v124 = vshrl.u32 %v123, 7
    %v125 = vsub.s32 5, %v124
    %v126 = vrot.slane %v101, %v125
    %v127 = vlaneseq
    %v128 = vshrl.u32 %v127, 7
    %v129 = vsub.s32 6, %v128
    %v130 = vrot.slane %v101, %v129
    %v131 = vlaneseq
    %v132 = vshrl.u32 %v131, 7
    %v133 = vsub.s32 7, %v132
    %v134 = vrot.slane %v101, %v133
    %vm143 = vcmask 392192
    %v145 = vsel %vm143, %v52, 0
    %147 = vmatprep.subr.mxu0 0.0
    %148 = vmatpush1.msra.mxu0 0.0
    %149 = vmatprep.subr.mxu0 0.0
    %150 = vmatpush1.msra.mxu0 0.0
    %151 = vmatprep.subr.mxu0 0.0
    %152 = vmatpush1.msra.mxu0 0.0
    %153 = vmatprep.subr.mxu0 0.0
    %154 = vmatpush1.msra.mxu0 0.0
    %155 = vmatprep.subr.mxu0 0.0
    %156 = vmatpush1.msra.mxu0 0.0
    %157 = vmatprep.subr.mxu0 0.0
    %158 = vmatpush1.msra.mxu0 0.0
    %159 = vmatprep.subr.mxu0 0.0
    %160 = vmatpush1.msra.mxu0 0.0
    %161 = vmatprep.subr.mxu0 0.0
    %162 = vmatpush1.msra.mxu0 0.0
    %163 = vmatprep.subr.mxu0 0.0
    %164 = vmatpush1.msra.mxu0 0.0
    %165 = vmatprep.subr.mxu0 0.0
    %166 = vmatpush1.msra.mxu0 0.0
    %167 = vmatprep.subr.mxu0 %v94
    %168 = vmatpush1.msra.mxu0 %v93
    %169 = vmatprep.subr.mxu0 %v86
    %170 = vmatpush1.msra.mxu0 %v85
    %171 = vmatprep.subr.mxu0 %v78
    %172 = vmatpush1.msra.mxu0 %v77
    %173 = vmatprep.subr.mxu0 %v70
    %174 = vmatpush1.msra.mxu0 %v69
    %175 = vmatprep.subr.mxu0 %v62
    %176 = vmatpush1.msra.mxu0 %v61
    %177 = vmatprep.subr.mxu0 %v54
    %178 = vmatpush1.msra.mxu0 %v53
    %179 = vmatprep.subr.mxu0 0.0
    %180 = vmatpush2.msra.mxu0 0.0
    %181 = vmatprep.subr.mxu0 0.0
    %182 = vmatpush2.msra.mxu0 0.0
    %183 = vmatprep.subr.mxu0 0.0
    %184 = vmatpush2.msra.mxu0 0.0
    %185 = vmatprep.subr.mxu0 0.0
    %186 = vmatpush2.msra.mxu0 0.0
    %187 = vmatprep.subr.mxu0 0.0
    %188 = vmatpush2.msra.mxu0 0.0
    %189 = vmatprep.subr.mxu0 0.0
    %190 = vmatpush2.msra.mxu0 0.0
    %191 = vmatprep.subr.mxu0 0.0
    %192 = vmatpush2.msra.mxu0 0.0
    %193 = vmatprep.subr.mxu0 0.0
    %194 = vmatpush2.msra.mxu0 0.0
    %195 = vmatprep.subr.mxu0 0.0
    %196 = vmatpush2.msra.mxu0 0.0
    %197 = vmatprep.subr.mxu0 0.0
    %198 = vmatpush2.msra.mxu0 0.0
    %199 = vmatprep.subr.mxu0 0.0
    %200 = vmatpush2.msra.mxu0 0.0
    %201 = vmatprep.subr.mxu0 0.0
    %202 = vmatpush2.msra.mxu0 0.0
    %203 = vmatprep.subr.mxu0 0.0
    %204 = vmatpush2.msra.mxu0 0.0
    %205 = vmatprep.subr.mxu0 0.0
    %206 = vmatpush2.msra.mxu0 0.0
    %207 = vmatprep.subr.mxu0 0.0
    %208 = vmatpush2.msra.mxu0 0.0
    %209 = vmatprep.subr.mxu0 0.0
    %210 = vmatpush2.msra.mxu0 0.0
    %211 = vmatprep.mubr.f32.mxu0 0.0
    %212 = vmatmul.mubr.f32.gmra.mxu0 %v145
    %v213 = vpop.f32.mrf.mxu0
    %v214 = vadd.f32 %v106, %v213
    %v215 = vpop.f32.mrf.mxu0
    %v216 = vadd.f32 %v110, %v215
    %217 = vdwg.mxu0
    %218 = vmatprep.subr.mxu0 0.0
    %219 = vmatpush1.msra.mxu0 0.0
    %220 = vmatprep.subr.mxu0 0.0
    %221 = vmatpush1.msra.mxu0 0.0
    %222 = vmatprep.subr.mxu0 0.0
    %223 = vmatpush1.msra.mxu0 0.0
    %224 = vmatprep.subr.mxu0 0.0
    %225 = vmatpush1.msra.mxu0 0.0
    %226 = vmatprep.subr.mxu0 0.0
    %227 = vmatpush1.msra.mxu0 0.0
    %228 = vmatprep.subr.mxu0 0.0
    %229 = vmatpush1.msra.mxu0 0.0
    %230 = vmatprep.subr.mxu0 0.0
    %231 = vmatpush1.msra.mxu0 0.0
    %232 = vmatprep.subr.mxu0 0.0
    %233 = vmatpush1.msra.mxu0 0.0
    %234 = vmatprep.subr.mxu0 0.0
    %235 = vmatpush1.msra.mxu0 0.0
    %236 = vmatprep.subr.mxu0 0.0
    %237 = vmatpush1.msra.mxu0 0.0
    %238 = vmatprep.subr.mxu0 %v96
    %239 = vmatpush1.msra.mxu0 %v95
    %240 = vmatprep.subr.mxu0 %v88
    %241 = vmatpush1.msra.mxu0 %v87
    %242 = vmatprep.subr.mxu0 %v80
    %243 = vmatpush1.msra.mxu0 %v79
    %244 = vmatprep.subr.mxu0 %v72
    %245 = vmatpush1.msra.mxu0 %v71
    %246 = vmatprep.subr.mxu0 %v64
    %247 = vmatpush1.msra.mxu0 %v63
    %248 = vmatprep.subr.mxu0 %v56
    %249 = vmatpush1.msra.mxu0 %v55
    %250 = vmatprep.subr.mxu0 0.0
    %251 = vmatpush2.msra.mxu0 0.0
    %252 = vmatprep.subr.mxu0 0.0
    %253 = vmatpush2.msra.mxu0 0.0
    %254 = vmatprep.subr.mxu0 0.0
    %255 = vmatpush2.msra.mxu0 0.0
    %256 = vmatprep.subr.mxu0 0.0
    %257 = vmatpush2.msra.mxu0 0.0
    %258 = vmatprep.subr.mxu0 0.0
    %259 = vmatpush2.msra.mxu0 0.0
    %260 = vmatprep.subr.mxu0 0.0
    %261 = vmatpush2.msra.mxu0 0.0
    %262 = vmatprep.subr.mxu0 0.0
    %263 = vmatpush2.msra.mxu0 0.0
    %264 = vmatprep.subr.mxu0 0.0
    %265 = vmatpush2.msra.mxu0 0.0
    %266 = vmatprep.subr.mxu0 0.0
    %267 = vmatpush2.msra.mxu0 0.0
    %268 = vmatprep.subr.mxu0 0.0
    %269 = vmatpush2.msra.mxu0 0.0
    %270 = vmatprep.subr.mxu0 0.0
    %271 = vmatpush2.msra.mxu0 0.0
    %272 = vmatprep.subr.mxu0 0.0
    %273 = vmatpush2.msra.mxu0 0.0
    %274 = vmatprep.subr.mxu0 0.0
    %275 = vmatpush2.msra.mxu0 0.0
    %276 = vmatprep.subr.mxu0 0.0
    %277 = vmatpush2.msra.mxu0 0.0
    %278 = vmatprep.subr.mxu0 0.0
    %279 = vmatpush2.msra.mxu0 0.0
    %280 = vmatprep.subr.mxu0 0.0
    %281 = vmatpush2.msra.mxu0 0.0
    %282 = vmatprep.mubr.f32.mxu0 0.0
    %283 = vmatmul.mubr.f32.gmra.mxu0 %v145
    %v284 = vpop.f32.mrf.mxu0
    %v285 = vadd.f32 %v114, %v284
    %v286 = vpop.f32.mrf.mxu0
    %v287 = vadd.f32 %v118, %v286
    %288 = vdwg.mxu0
    %289 = vmatprep.subr.mxu0 0.0
    %290 = vmatpush1.msra.mxu0 0.0
    %291 = vmatprep.subr.mxu0 0.0
    %292 = vmatpush1.msra.mxu0 0.0
    %293 = vmatprep.subr.mxu0 0.0
    %294 = vmatpush1.msra.mxu0 0.0
    %295 = vmatprep.subr.mxu0 0.0
    %296 = vmatpush1.msra.mxu0 0.0
    %297 = vmatprep.subr.mxu0 0.0
    %298 = vmatpush1.msra.mxu0 0.0
    %299 = vmatprep.subr.mxu0 0.0
    %300 = vmatpush1.msra.mxu0 0.0
    %301 = vmatprep.subr.mxu0 0.0
    %302 = vmatpush1.msra.mxu0 0.0
    %303 = vmatprep.subr.mxu0 0.0
    %304 = vmatpush1.msra.mxu0 0.0
    %305 = vmatprep.subr.mxu0 0.0
    %306 = vmatpush1.msra.mxu0 0.0
    %307 = vmatprep.subr.mxu0 0.0
    %308 = vmatpush1.msra.mxu0 0.0
    %309 = vmatprep.subr.mxu0 %v98
    %310 = vmatpush1.msra.mxu0 %v97
    %311 = vmatprep.subr.mxu0 %v90
    %312 = vmatpush1.msra.mxu0 %v89
    %313 = vmatprep.subr.mxu0 %v82
    %314 = vmatpush1.msra.mxu0 %v81
    %315 = vmatprep.subr.mxu0 %v74
    %316 = vmatpush1.msra.mxu0 %v73
    %317 = vmatprep.subr.mxu0 %v66
    %318 = vmatpush1.msra.mxu0 %v65
    %319 = vmatprep.subr.mxu0 %v58
    %320 = vmatpush1.msra.mxu0 %v57
    %321 = vmatprep.subr.mxu0 0.0
    %322 = vmatpush2.msra.mxu0 0.0
    %323 = vmatprep.subr.mxu0 0.0
    %324 = vmatpush2.msra.mxu0 0.0
    %325 = vmatprep.subr.mxu0 0.0
    %326 = vmatpush2.msra.mxu0 0.0
    %327 = vmatprep.subr.mxu0 0.0
    %328 = vmatpush2.msra.mxu0 0.0
    %329 = vmatprep.subr.mxu0 0.0
    %330 = vmatpush2.msra.mxu0 0.0
    %331 = vmatprep.subr.mxu0 0.0
    %332 = vmatpush2.msra.mxu0 0.0
    %333 = vmatprep.subr.mxu0 0.0
    %334 = vmatpush2.msra.mxu0 0.0
    %335 = vmatprep.subr.mxu0 0.0
    %336 = vmatpush2.msra.mxu0 0.0
    %337 = vmatprep.subr.mxu0 0.0
    %338 = vmatpush2.msra.mxu0 0.0
    %339 = vmatprep.subr.mxu0 0.0
    %340 = vmatpush2.msra.mxu0 0.0
    %341 = vmatprep.subr.mxu0 0.0
    %342 = vmatpush2.msra.mxu0 0.0
    %343 = vmatprep.subr.mxu0 0.0
    %344 = vmatpush2.msra.mxu0 0.0
    %345 = vmatprep.subr.mxu0 0.0
    %346 = vmatpush2.msra.mxu0 0.0
    %347 = vmatprep.subr.mxu0 0.0
    %348 = vmatpush2.msra.mxu0 0.0
    %349 = vmatprep.subr.mxu0 0.0
    %350 = vmatpush2.msra.mxu0 0.0
    %351 = vmatprep.subr.mxu0 0.0
    %352 = vmatpush2.msra.mxu0 0.0
    %353 = vmatprep.mubr.f32.mxu0 0.0
    %354 = vmatmul.mubr.f32.gmra.mxu0 %v145
    %v355 = vpop.f32.mrf.mxu0
    %v356 = vadd.f32 %v122, %v355
    %v357 = vpop.f32.mrf.mxu0
    %v358 = vadd.f32 %v126, %v357
    %359 = vdwg.mxu0
    %360 = vmatprep.subr.mxu0 0.0
    %361 = vmatpush1.msra.mxu0 0.0
    %362 = vmatprep.subr.mxu0 0.0
    %363 = vmatpush1.msra.mxu0 0.0
    %364 = vmatprep.subr.mxu0 0.0
    %365 = vmatpush1.msra.mxu0 0.0
    %366 = vmatprep.subr.mxu0 0.0
    %367 = vmatpush1.msra.mxu0 0.0
    %368 = vmatprep.subr.mxu0 0.0
    %369 = vmatpush1.msra.mxu0 0.0
    %370 = vmatprep.subr.mxu0 0.0
    %371 = vmatpush1.msra.mxu0 0.0
    %372 = vmatprep.subr.mxu0 0.0
    %373 = vmatpush1.msra.mxu0 0.0
    %374 = vmatprep.subr.mxu0 0.0
    %375 = vmatpush1.msra.mxu0 0.0
    %376 = vmatprep.subr.mxu0 0.0
    %377 = vmatpush1.msra.mxu0 0.0
    %378 = vmatprep.subr.mxu0 0.0
    %379 = vmatpush1.msra.mxu0 0.0
    %380 = vmatprep.subr.mxu0 %v100
    %381 = vmatpush1.msra.mxu0 %v99
    %382 = vmatprep.subr.mxu0 %v92
    %383 = vmatpush1.msra.mxu0 %v91
    %384 = vmatprep.subr.mxu0 %v84
    %385 = vmatpush1.msra.mxu0 %v83
    %386 = vmatprep.subr.mxu0 %v76
    %387 = vmatpush1.msra.mxu0 %v75
    %388 = vmatprep.subr.mxu0 %v68
    %389 = vmatpush1.msra.mxu0 %v67
    %390 = vmatprep.subr.mxu0 %v60
    %391 = vmatpush1.msra.mxu0 %v59
    %392 = vmatprep.subr.mxu0 0.0
    %393 = vmatpush2.msra.mxu0 0.0
    %394 = vmatprep.subr.mxu0 0.0
    %395 = vmatpush2.msra.mxu0 0.0
    %396 = vmatprep.subr.mxu0 0.0
    %397 = vmatpush2.msra.mxu0 0.0
    %398 = vmatprep.subr.mxu0 0.0
    %399 = vmatpush2.msra.mxu0 0.0
    %400 = vmatprep.subr.mxu0 0.0
    %401 = vmatpush2.msra.mxu0 0.0
    %402 = vmatprep.subr.mxu0 0.0
    %403 = vmatpush2.msra.mxu0 0.0
    %404 = vmatprep.subr.mxu0 0.0
    %405 = vmatpush2.msra.mxu0 0.0
    %406 = vmatprep.subr.mxu0 0.0
    %407 = vmatpush2.msra.mxu0 0.0
    %408 = vmatprep.subr.mxu0 0.0
    %409 = vmatpush2.msra.mxu0 0.0
    %410 = vmatprep.subr.mxu0 0.0
    %411 = vmatpush2.msra.mxu0 0.0
    %412 = vmatprep.subr.mxu0 0.0
    %413 = vmatpush2.msra.mxu0 0.0
    %414 = vmatprep.subr.mxu0 0.0
    %415 = vmatpush2.msra.mxu0 0.0
    %416 = vmatprep.subr.mxu0 0.0
    %417 = vmatpush2.msra.mxu0 0.0
    %418 = vmatprep.subr.mxu0 0.0
    %419 = vmatpush2.msra.mxu0 0.0
    %420 = vmatprep.subr.mxu0 0.0
    %421 = vmatpush2.msra.mxu0 0.0
    %422 = vmatprep.subr.mxu0 0.0
    %423 = vmatpush2.msra.mxu0 0.0
    %424 = vmatprep.mubr.f32.mxu0 0.0
    %425 = vmatmul.mubr.f32.gmra.mxu0 %v145
    %v426 = vpop.f32.mrf.mxu0
    %v427 = vadd.f32 %v130, %v426
    %v428 = vpop.f32.mrf.mxu0
    %v429 = vadd.f32 %v134, %v428
    %430 = vdwg.mxu0
    %v431 = vlaneseq
    %v432 = vand.u32 %v431, 127
    %v433 = vadd.s32 %v432, 128
    %v434 = vadd.s32 %v432, 256
    %v435 = vadd.s32 %v432, 384
    %v436 = vadd.s32 %v432, 512
    %v437 = vadd.s32 %v432, 640
    %v438 = vadd.s32 %v432, 768
    %v439 = vadd.s32 %v432, 896
    %vm440 = vcmp.lt.s32.totalorder %v432, 0
    %v441 = vsub.s32 0, %v432
    %v442 = vsel %vm440, %v441, %v432
    %v443 = vshrl.u32 %v442, 6
    %v444 = vand.u32 %v442, 63
    %v445 = vsub.s32 0, %v444
    %v446 = vsel %vm440, %v445, %v444
    %vm447 = vcmp.lt.s32.totalorder %v433, 0
    %v448 = vsub.s32 0, %v433
    %v449 = vsel %vm447, %v448, %v433
    %v450 = vshrl.u32 %v449, 6
    %v451 = vand.u32 %v449, 63
    %v452 = vsub.s32 0, %v451
    %v453 = vsel %vm447, %v452, %v451
    %vm454 = vcmp.lt.s32.totalorder %v434, 0
    %v455 = vsub.s32 0, %v434
    %v456 = vsel %vm454, %v455, %v434
    %v457 = vshrl.u32 %v456, 6
    %v458 = vand.u32 %v456, 63
    %v459 = vsub.s32 0, %v458
    %v460 = vsel %vm454, %v459, %v458
    %vm461 = vcmp.lt.s32.totalorder %v435, 0
    %v462 = vsub.s32 0, %v435
    %v463 = vsel %vm461, %v462, %v435
    %v464 = vshrl.u32 %v463, 6
    %v465 = vand.u32 %v463, 63
    %v466 = vsub.s32 0, %v465
    %v467 = vsel %vm461, %v466, %v465
    %vm468 = vcmp.lt.s32.totalorder %v436, 0
    %v469 = vsub.s32 0, %v436
    %v470 = vsel %vm468, %v469, %v436
    %v471 = vshrl.u32 %v470, 6
    %v472 = vand.u32 %v470, 63
    %v473 = vsub.s32 0, %v472
    %v474 = vsel %vm468, %v473, %v472
    %vm475 = vcmp.lt.s32.totalorder %v437, 0
    %v476 = vsub.s32 0, %v437
    %v477 = vsel %vm475, %v476, %v437
    %v478 = vshrl.u32 %v477, 6
    %v479 = vand.u32 %v477, 63
    %v480 = vsub.s32 0, %v479
    %v481 = vsel %vm475, %v480, %v479
    %vm482 = vcmp.lt.s32.totalorder %v438, 0
    %v483 = vsub.s32 0, %v438
    %v484 = vsel %vm482, %v483, %v438
    %v485 = vshrl.u32 %v484, 6
    %v486 = vand.u32 %v484, 63
    %v487 = vsub.s32 0, %v486
    %v488 = vsel %vm482, %v487, %v486
    %vm489 = vcmp.lt.s32.totalorder %v439, 0
    %v490 = vsub.s32 0, %v439
    %v491 = vsel %vm489, %v490, %v439
    %v492 = vshrl.u32 %v491, 6
    %v493 = vand.u32 %v491, 63
    %v494 = vsub.s32 0, %v493
    %v495 = vsel %vm489, %v494, %v493
    %vm496 = vcmp.ne.s32.totalorder %v446, 0
    %vm497 = vcmp.ne.s32.totalorder %v453, 0
    %vm498 = vcmp.ne.s32.totalorder %v460, 0
    %vm499 = vcmp.ne.s32.totalorder %v467, 0
    %vm500 = vcmp.ne.s32.totalorder %v474, 0
    %vm501 = vcmp.ne.s32.totalorder %v481, 0
    %vm502 = vcmp.ne.s32.totalorder %v488, 0
    %vm503 = vcmp.ne.s32.totalorder %v495, 0
    %vm504 = vcmp.lt.s32.totalorder %v446, 0
    %vm505 = vcmp.lt.s32.totalorder %v453, 0
    %vm506 = vcmp.lt.s32.totalorder %v460, 0
    %vm507 = vcmp.lt.s32.totalorder %v467, 0
    %vm508 = vcmp.lt.s32.totalorder %v474, 0
    %vm509 = vcmp.lt.s32.totalorder %v481, 0
    %vm510 = vcmp.lt.s32.totalorder %v488, 0
    %vm511 = vcmp.lt.s32.totalorder %v495, 0
    %vm512 = vmand %vm504, %vm496
    %vm513 = vmand %vm505, %vm497
    %vm514 = vmand %vm506, %vm498
    %vm515 = vmand %vm507, %vm499
    %vm516 = vmand %vm508, %vm500
    %vm517 = vmand %vm509, %vm501
    %vm518 = vmand %vm510, %vm502
    %vm519 = vmand %vm511, %vm503
    %v520 = vadd.s32 %v446, 64
    %v521 = vadd.s32 %v453, 64
    %v522 = vadd.s32 %v460, 64
    %v523 = vadd.s32 %v467, 64
    %v524 = vadd.s32 %v474, 64
    %v525 = vadd.s32 %v481, 64
    %v526 = vadd.s32 %v488, 64
    %v527 = vadd.s32 %v495, 64
    %v528 = vsel %vm512, %v520, %v446
    %v529 = vsel %vm513, %v521, %v453
    %v530 = vsel %vm514, %v522, %v460
    %v531 = vsel %vm515, %v523, %v467
    %v532 = vsel %vm516, %v524, %v474
    %v533 = vsel %vm517, %v525, %v481
    %v534 = vsel %vm518, %v526, %v488
    %v535 = vsel %vm519, %v527, %v495
    %vm536 = vcmp.eq.s32.totalorder %v528, 0
    %vm537 = vcmp.eq.s32.totalorder %v529, 0
    %vm538 = vcmp.eq.s32.totalorder %v530, 0
    %vm539 = vcmp.eq.s32.totalorder %v531, 0
    %vm540 = vcmp.eq.s32.totalorder %v532, 0
    %vm541 = vcmp.eq.s32.totalorder %v533, 0
    %vm542 = vcmp.eq.s32.totalorder %v534, 0
    %vm543 = vcmp.eq.s32.totalorder %v535, 0
    %v544 = vand.u32 2147483647, %v214
    %vm545 = vcmp.le.f32.partialorder %v544, 0.7853982
    %vm546 = vcmp.lt.s32.totalorder %v214, 0
    %v547 = vand.u32 %v214, 2139095040
    %v548 = vshrl.u32 %v547, 23
    %v549 = vsub.s32 %v548, 127
    %v550 = vand.u32 2147483647, %v214
    %v551 = vand.u32 %v550, 8388607
    %v552 = vor.u32 %v551, 8388608
    %v553 = vsub.s32 0, %v552
    %v554 = vadd.s32 %v549, 1
    %vm555 = vcmp.gt.s32.totalorder %v554, 0
    %v556 = vsel %vm555, %v554, 0
    %v557 = vshrl.u32 %v556, 5
    %v558 = vand.u32 %v556, 31
    %v559 = vsub.s32 32, %v558
    %v560 = vshrl.u32 683565275, %v559
    %v561 = vshll.u32 683565275, %v558
    %v562 = vshrl.u32 2475754826, %v559
    %v563 = vor.u32 %v561, %v562
    %v564 = vshll.u32 2475754826, %v558
    %v565 = vshrl.u32 2131351028, %v559
    %v566 = vor.u32 %v564, %v565
    %v567 = vshll.u32 2131351028, %v558
    %v568 = vshrl.u32 2102212464, %v559
    %v569 = vor.u32 %v567, %v568
    %v570 = vshll.u32 2102212464, %v558
    %v571 = vshrl.u32 920167782, %v559
    %v572 = vor.u32 %v570, %v571
    %v573 = vshll.u32 920167782, %v558
    %v574 = vshrl.u32 1326507024, %v559
    %v575 = vor.u32 %v573, %v574
    %vm576 = vcmp.lt.s32.totalorder %v557, 1
    %vm577 = vcmp.lt.s32.totalorder %v557, 2
    %vm578 = vcmp.lt.s32.totalorder %v557, 3
    %vm579 = vcmp.lt.s32.totalorder %v557, 4
    %v580 = vsel %vm576, %v560, %v563
    %v581 = vsel %vm579, %v569, 2102212464
    %v582 = vsel %vm578, %v566, %v581
    %v583 = vsel %vm577, %v580, %v582
    %v584 = vsel %vm576, %v563, %v566
    %v585 = vsel %vm579, %v572, 920167782
    %v586 = vsel %vm578, %v569, %v585
    %v587 = vsel %vm577, %v584, %v586
    %v588 = vsel %vm576, %v566, %v569
    %v589 = vsel %vm579, %v575, 1326507024
    %v590 = vsel %vm578, %v572, %v589
    %v591 = vsel %vm577, %v588, %v590
    %v592 = vshll.u32 %v552, 8
    %v593 = vmul.u32.u64.compose %v592, %v591
    %v594 = vextract.low.u32 %v593
    %v595 = vextract.high.u32 %v593
    %v596 = vmul.u32.u64.compose %v592, %v587
    %v597 = vextract.low.u32 %v596
    %v598 = vextract.high.u32 %v596
    %v599 = vmul.u32 %v592, %v583
    %v600 = vadd.s32 %v595, %v597
    %vm601 = vc.u32 %v595, %v597
    %v602 = vadd.s32 %v598, 1
    %v603 = vsel %vm601, %v602, %v598
    %v604 = vadd.s32 %v599, %v603
    %v605 = vadd.s32 %v604, 536870912
    %v606 = vshrl.u32 %v605, 30
    %v607 = vshll.u32 %v606, 30
    %v608 = vsub.s32 %v604, %v607
    %vm609 = vcmp.lt.s32.totalorder %v608, 0
    %v610 = vsub.s32 0, %v608
    %v611 = vsel %vm609, %v610, %v608
    %v612 = vclz %v611
    %v613 = vsub.s32 %v612, 2
    %vm614 = vcmp.gt.s32.totalorder 0, %v613
    %v615 = vsel %vm614, 0, %v613
    %v616 = vsub.s32 32, %v615
    %v617 = vshll.u32 %v608, %v615
    %v618 = vshrl.u32 %v600, %v616
    %v619 = vor.u32 %v617, %v618
    %v620 = vsub.s32 4294967266, %v615
    %v621 = vadd.s32 %v620, 127
    %v622 = vshll.u32 %v621, 23
    %v623 = vor.u32 4788187, %v622
    %v624 = vand.u32 2147483647, %v623
    %v626 = vcvt.s32.f32 %v619
    %v627 = vmul.f32 %v626, %v624
    %v628 = vxor.u32 %v627, 2147483648
    %v629 = vsel %vm546, %v628, %v627
    %v630 = vsub.s32 4, %v606
    %v631 = vsel %vm546, %v630, %v606
    %v632 = vsel %vm545, %v214, %v629
    %v633 = vsel %vm545, 0, %v631
    %v634 = vcosq.f32.pop %v632
    %v635 = vsinq.f32.pop %v632
    %vm636 = vweird.f32 %v214
    %v637 = vadd.s32 %v633, 3
    %v638 = vand.u32 %v637, 3
    %vm639 = vcmp.lt.s32.totalorder %v638, 2
    %vm640 = vcmp.eq.s32.totalorder %v638, 0
    %v641 = vxor.u32 %v635, 2147483648
    %v642 = vsel %vm640, %v634, %v641
    %vm643 = vcmp.eq.s32.totalorder %v638, 2
    %v644 = vxor.u32 %v634, 2147483648
    %v645 = vsel %vm643, %v644, %v635
    %v646 = vsel %vm639, %v642, %v645
    %v647 = vsel %vm636, nan, %v646
    %v648 = vand.u32 2147483647, %v216
    %vm649 = vcmp.le.f32.partialorder %v648, 0.7853982
    %vm650 = vcmp.lt.s32.totalorder %v216, 0
    %v651 = vand.u32 %v216, 2139095040
    %v652 = vshrl.u32 %v651, 23
    %v653 = vsub.s32 %v652, 127
    %v654 = vand.u32 2147483647, %v216
    %v655 = vand.u32 %v654, 8388607
    %v656 = vor.u32 %v655, 8388608
    %v657 = vsub.s32 0, %v656
    %v658 = vadd.s32 %v653, 1
    %vm659 = vcmp.gt.s32.totalorder %v658, 0
    %v660 = vsel %vm659, %v658, 0
    %v661 = vshrl.u32 %v660, 5
    %v662 = vand.u32 %v660, 31
    %v663 = vsub.s32 32, %v662
    %v664 = vshrl.u32 683565275, %v663
    %v665 = vshll.u32 683565275, %v662
    %v666 = vshrl.u32 2475754826, %v663
    %v667 = vor.u32 %v665, %v666
    %v668 = vshll.u32 2475754826, %v662
    %v669 = vshrl.u32 2131351028, %v663
    %v670 = vor.u32 %v668, %v669
    %v671 = vshll.u32 2131351028, %v662
    %v672 = vshrl.u32 2102212464, %v663
    %v673 = vor.u32 %v671, %v672
    %v674 = vshll.u32 2102212464, %v662
    %v675 = vshrl.u32 920167782, %v663
    %v676 = vor.u32 %v674, %v675
    %v677 = vshll.u32 920167782, %v662
    %v678 = vshrl.u32 1326507024, %v663
    %v679 = vor.u32 %v677, %v678
    %vm680 = vcmp.lt.s32.totalorder %v661, 1
    %vm681 = vcmp.lt.s32.totalorder %v661, 2
    %vm682 = vcmp.lt.s32.totalorder %v661, 3
    %vm683 = vcmp.lt.s32.totalorder %v661, 4
    %v684 = vsel %vm680, %v664, %v667
    %v685 = vsel %vm683, %v673, 2102212464
    %v686 = vsel %vm682, %v670, %v685
    %v687 = vsel %vm681, %v684, %v686
    %v688 = vsel %vm680, %v667, %v670
    %v689 = vsel %vm683, %v676, 920167782
    %v690 = vsel %vm682, %v673, %v689
    %v691 = vsel %vm681, %v688, %v690
    %v692 = vsel %vm680, %v670, %v673
    %v693 = vsel %vm683, %v679, 1326507024
    %v694 = vsel %vm682, %v676, %v693
    %v695 = vsel %vm681, %v692, %v694
    %v696 = vshll.u32 %v656, 8
    %v697 = vmul.u32.u64.compose %v696, %v695
    %v698 = vextract.low.u32 %v697
    %v699 = vextract.high.u32 %v697
    %v700 = vmul.u32.u64.compose %v696, %v691
    %v701 = vextract.low.u32 %v700
    %v702 = vextract.high.u32 %v700
    %v703 = vmul.u32 %v696, %v687
    %v704 = vadd.s32 %v699, %v701
    %vm705 = vc.u32 %v699, %v701
    %v706 = vadd.s32 %v702, 1
    %v707 = vsel %vm705, %v706, %v702
    %v708 = vadd.s32 %v703, %v707
    %v709 = vadd.s32 %v708, 536870912
    %v710 = vshrl.u32 %v709, 30
    %v711 = vshll.u32 %v710, 30
    %v712 = vsub.s32 %v708, %v711
    %vm713 = vcmp.lt.s32.totalorder %v712, 0
    %v714 = vsub.s32 0, %v712
    %v715 = vsel %vm713, %v714, %v712
    %v716 = vclz %v715
    %v717 = vsub.s32 %v716, 2
    %vm718 = vcmp.gt.s32.totalorder 0, %v717
    %v719 = vsel %vm718, 0, %v717
    %v720 = vsub.s32 32, %v719
    %v721 = vshll.u32 %v712, %v719
    %v722 = vshrl.u32 %v704, %v720
    %v723 = vor.u32 %v721, %v722
    %v724 = vsub.s32 4294967266, %v719
    %v725 = vadd.s32 %v724, 127
    %v726 = vshll.u32 %v725, 23
    %v727 = vor.u32 4788187, %v726
    %v728 = vand.u32 2147483647, %v727
    %v730 = vcvt.s32.f32 %v723
    %v731 = vmul.f32 %v730, %v728
    %v732 = vxor.u32 %v731, 2147483648
    %v733 = vsel %vm650, %v732, %v731
    %v734 = vsub.s32 4, %v710
    %v735 = vsel %vm650, %v734, %v710
    %v736 = vsel %vm649, %v216, %v733
    %v737 = vsel %vm649, 0, %v735
    %v738 = vcosq.f32.pop %v736
    %v739 = vsinq.f32.pop %v736
    %vm740 = vweird.f32 %v216
    %v741 = vadd.s32 %v737, 3
    %v742 = vand.u32 %v741, 3
    %vm743 = vcmp.lt.s32.totalorder %v742, 2
    %vm744 = vcmp.eq.s32.totalorder %v742, 0
    %v745 = vxor.u32 %v739, 2147483648
    %v746 = vsel %vm744, %v738, %v745
    %vm747 = vcmp.eq.s32.totalorder %v742, 2
    %v748 = vxor.u32 %v738, 2147483648
    %v749 = vsel %vm747, %v748, %v739
    %v750 = vsel %vm743, %v746, %v749
    %v751 = vsel %vm740, nan, %v750
    %v752 = vand.u32 2147483647, %v285
    %vm753 = vcmp.le.f32.partialorder %v752, 0.7853982
    %vm754 = vcmp.lt.s32.totalorder %v285, 0
    %v755 = vand.u32 %v285, 2139095040
    %v756 = vshrl.u32 %v755, 23
    %v757 = vsub.s32 %v756, 127
    %v758 = vand.u32 2147483647, %v285
    %v759 = vand.u32 %v758, 8388607
    %v760 = vor.u32 %v759, 8388608
    %v761 = vsub.s32 0, %v760
    %v762 = vadd.s32 %v757, 1
    %vm763 = vcmp.gt.s32.totalorder %v762, 0
    %v764 = vsel %vm763, %v762, 0
    %v765 = vshrl.u32 %v764, 5
    %v766 = vand.u32 %v764, 31
    %v767 = vsub.s32 32, %v766
    %v768 = vshrl.u32 683565275, %v767
    %v769 = vshll.u32 683565275, %v766
    %v770 = vshrl.u32 2475754826, %v767
    %v771 = vor.u32 %v769, %v770
    %v772 = vshll.u32 2475754826, %v766
    %v773 = vshrl.u32 2131351028, %v767
    %v774 = vor.u32 %v772, %v773
    %v775 = vshll.u32 2131351028, %v766
    %v776 = vshrl.u32 2102212464, %v767
    %v777 = vor.u32 %v775, %v776
    %v778 = vshll.u32 2102212464, %v766
    %v779 = vshrl.u32 920167782, %v767
    %v780 = vor.u32 %v778, %v779
    %v781 = vshll.u32 920167782, %v766
    %v782 = vshrl.u32 1326507024, %v767
    %v783 = vor.u32 %v781, %v782
    %vm784 = vcmp.lt.s32.totalorder %v765, 1
    %vm785 = vcmp.lt.s32.totalorder %v765, 2
    %vm786 = vcmp.lt.s32.totalorder %v765, 3
    %vm787 = vcmp.lt.s32.totalorder %v765, 4
    %v788 = vsel %vm784, %v768, %v771
    %v789 = vsel %vm787, %v777, 2102212464
    %v790 = vsel %vm786, %v774, %v789
    %v791 = vsel %vm785, %v788, %v790
    %v792 = vsel %vm784, %v771, %v774
    %v793 = vsel %vm787, %v780, 920167782
    %v794 = vsel %vm786, %v777, %v793
    %v795 = vsel %vm785, %v792, %v794
    %v796 = vsel %vm784, %v774, %v777
    %v797 = vsel %vm787, %v783, 1326507024
    %v798 = vsel %vm786, %v780, %v797
    %v799 = vsel %vm785, %v796, %v798
    %v800 = vshll.u32 %v760, 8
    %v801 = vmul.u32.u64.compose %v800, %v799
    %v802 = vextract.low.u32 %v801
    %v803 = vextract.high.u32 %v801
    %v804 = vmul.u32.u64.compose %v800, %v795
    %v805 = vextract.low.u32 %v804
    %v806 = vextract.high.u32 %v804
    %v807 = vmul.u32 %v800, %v791
    %v808 = vadd.s32 %v803, %v805
    %vm809 = vc.u32 %v803, %v805
    %v810 = vadd.s32 %v806, 1
    %v811 = vsel %vm809, %v810, %v806
    %v812 = vadd.s32 %v807, %v811
    %v813 = vadd.s32 %v812, 536870912
    %v814 = vshrl.u32 %v813, 30
    %v815 = vshll.u32 %v814, 30
    %v816 = vsub.s32 %v812, %v815
    %vm817 = vcmp.lt.s32.totalorder %v816, 0
    %v818 = vsub.s32 0, %v816
    %v819 = vsel %vm817, %v818, %v816
    %v820 = vclz %v819
    %v821 = vsub.s32 %v820, 2
    %vm822 = vcmp.gt.s32.totalorder 0, %v821
    %v823 = vsel %vm822, 0, %v821
    %v824 = vsub.s32 32, %v823
    %v825 = vshll.u32 %v816, %v823
    %v826 = vshrl.u32 %v808, %v824
    %v827 = vor.u32 %v825, %v826
    %v828 = vsub.s32 4294967266, %v823
    %v829 = vadd.s32 %v828, 127
    %v830 = vshll.u32 %v829, 23
    %v831 = vor.u32 4788187, %v830
    %v832 = vand.u32 2147483647, %v831
    %v834 = vcvt.s32.f32 %v827
    %v835 = vmul.f32 %v834, %v832
    %v836 = vxor.u32 %v835, 2147483648
    %v837 = vsel %vm754, %v836, %v835
    %v838 = vsub.s32 4, %v814
    %v839 = vsel %vm754, %v838, %v814
    %v840 = vsel %vm753, %v285, %v837
    %v841 = vsel %vm753, 0, %v839
    %v842 = vcosq.f32.pop %v840
    %v843 = vsinq.f32.pop %v840
    %vm844 = vweird.f32 %v285
    %v845 = vadd.s32 %v841, 3
    %v846 = vand.u32 %v845, 3
    %vm847 = vcmp.lt.s32.totalorder %v846, 2
    %vm848 = vcmp.eq.s32.totalorder %v846, 0
    %v849 = vxor.u32 %v843, 2147483648
    %v850 = vsel %vm848, %v842, %v849
    %vm851 = vcmp.eq.s32.totalorder %v846, 2
    %v852 = vxor.u32 %v842, 2147483648
    %v853 = vsel %vm851, %v852, %v843
    %v854 = vsel %vm847, %v850, %v853
    %v855 = vsel %vm844, nan, %v854
    %v856 = vand.u32 2147483647, %v287
    %vm857 = vcmp.le.f32.partialorder %v856, 0.7853982
    %vm858 = vcmp.lt.s32.totalorder %v287, 0
    %v859 = vand.u32 %v287, 2139095040
    %v860 = vshrl.u32 %v859, 23
    %v861 = vsub.s32 %v860, 127
    %v862 = vand.u32 2147483647, %v287
    %v863 = vand.u32 %v862, 8388607
    %v864 = vor.u32 %v863, 8388608
    %v865 = vsub.s32 0, %v864
    %v866 = vadd.s32 %v861, 1
    %vm867 = vcmp.gt.s32.totalorder %v866, 0
    %v868 = vsel %vm867, %v866, 0
    %v869 = vshrl.u32 %v868, 5
    %v870 = vand.u32 %v868, 31
    %v871 = vsub.s32 32, %v870
    %v872 = vshrl.u32 683565275, %v871
    %v873 = vshll.u32 683565275, %v870
    %v874 = vshrl.u32 2475754826, %v871
    %v875 = vor.u32 %v873, %v874
    %v876 = vshll.u32 2475754826, %v870
    %v877 = vshrl.u32 2131351028, %v871
    %v878 = vor.u32 %v876, %v877
    %v879 = vshll.u32 2131351028, %v870
    %v880 = vshrl.u32 2102212464, %v871
    %v881 = vor.u32 %v879, %v880
    %v882 = vshll.u32 2102212464, %v870
    %v883 = vshrl.u32 920167782, %v871
    %v884 = vor.u32 %v882, %v883
    %v885 = vshll.u32 920167782, %v870
    %v886 = vshrl.u32 1326507024, %v871
    %v887 = vor.u32 %v885, %v886
    %vm888 = vcmp.lt.s32.totalorder %v869, 1
    %vm889 = vcmp.lt.s32.totalorder %v869, 2
    %vm890 = vcmp.lt.s32.totalorder %v869, 3
    %vm891 = vcmp.lt.s32.totalorder %v869, 4
    %v892 = vsel %vm888, %v872, %v875
    %v893 = vsel %vm891, %v881, 2102212464
    %v894 = vsel %vm890, %v878, %v893
    %v895 = vsel %vm889, %v892, %v894
    %v896 = vsel %vm888, %v875, %v878
    %v897 = vsel %vm891, %v884, 920167782
    %v898 = vsel %vm890, %v881, %v897
    %v899 = vsel %vm889, %v896, %v898
    %v900 = vsel %vm888, %v878, %v881
    %v901 = vsel %vm891, %v887, 1326507024
    %v902 = vsel %vm890, %v884, %v901
    %v903 = vsel %vm889, %v900, %v902
    %v904 = vshll.u32 %v864, 8
    %v905 = vmul.u32.u64.compose %v904, %v903
    %v906 = vextract.low.u32 %v905
    %v907 = vextract.high.u32 %v905
    %v908 = vmul.u32.u64.compose %v904, %v899
    %v909 = vextract.low.u32 %v908
    %v910 = vextract.high.u32 %v908
    %v911 = vmul.u32 %v904, %v895
    %v912 = vadd.s32 %v907, %v909
    %vm913 = vc.u32 %v907, %v909
    %v914 = vadd.s32 %v910, 1
    %v915 = vsel %vm913, %v914, %v910
    %v916 = vadd.s32 %v911, %v915
    %v917 = vadd.s32 %v916, 536870912
    %v918 = vshrl.u32 %v917, 30
    %v919 = vshll.u32 %v918, 30
    %v920 = vsub.s32 %v916, %v919
    %vm921 = vcmp.lt.s32.totalorder %v920, 0
    %v922 = vsub.s32 0, %v920
    %v923 = vsel %vm921, %v922, %v920
    %v924 = vclz %v923
    %v925 = vsub.s32 %v924, 2
    %vm926 = vcmp.gt.s32.totalorder 0, %v925
    %v927 = vsel %vm926, 0, %v925
    %v928 = vsub.s32 32, %v927
    %v929 = vshll.u32 %v920, %v927
    %v930 = vshrl.u32 %v912, %v928
    %v931 = vor.u32 %v929, %v930
    %v932 = vsub.s32 4294967266, %v927
    %v933 = vadd.s32 %v932, 127
    %v934 = vshll.u32 %v933, 23
    %v935 = vor.u32 4788187, %v934
    %v936 = vand.u32 2147483647, %v935
    %v938 = vcvt.s32.f32 %v931
    %v939 = vmul.f32 %v938, %v936
    %v940 = vxor.u32 %v939, 2147483648
    %v941 = vsel %vm858, %v940, %v939
    %v942 = vsub.s32 4, %v918
    %v943 = vsel %vm858, %v942, %v918
    %v944 = vsel %vm857, %v287, %v941
    %v945 = vsel %vm857, 0, %v943
    %v946 = vcosq.f32.pop %v944
    %v947 = vsinq.f32.pop %v944
    %vm948 = vweird.f32 %v287
    %v949 = vadd.s32 %v945, 3
    %v950 = vand.u32 %v949, 3
    %vm951 = vcmp.lt.s32.totalorder %v950, 2
    %vm952 = vcmp.eq.s32.totalorder %v950, 0
    %v953 = vxor.u32 %v947, 2147483648
    %v954 = vsel %vm952, %v946, %v953
    %vm955 = vcmp.eq.s32.totalorder %v950, 2
    %v956 = vxor.u32 %v946, 2147483648
    %v957 = vsel %vm955, %v956, %v947
    %v958 = vsel %vm951, %v954, %v957
    %v959 = vsel %vm948, nan, %v958
    %v960 = vand.u32 2147483647, %v356
    %vm961 = vcmp.le.f32.partialorder %v960, 0.7853982
    %vm962 = vcmp.lt.s32.totalorder %v356, 0
    %v963 = vand.u32 %v356, 2139095040
    %v964 = vshrl.u32 %v963, 23
    %v965 = vsub.s32 %v964, 127
    %v966 = vand.u32 2147483647, %v356
    %v967 = vand.u32 %v966, 8388607
    %v968 = vor.u32 %v967, 8388608
    %v969 = vsub.s32 0, %v968
    %v970 = vadd.s32 %v965, 1
    %vm971 = vcmp.gt.s32.totalorder %v970, 0
    %v972 = vsel %vm971, %v970, 0
    %v973 = vshrl.u32 %v972, 5
    %v974 = vand.u32 %v972, 31
    %v975 = vsub.s32 32, %v974
    %v976 = vshrl.u32 683565275, %v975
    %v977 = vshll.u32 683565275, %v974
    %v978 = vshrl.u32 2475754826, %v975
    %v979 = vor.u32 %v977, %v978
    %v980 = vshll.u32 2475754826, %v974
    %v981 = vshrl.u32 2131351028, %v975
    %v982 = vor.u32 %v980, %v981
    %v983 = vshll.u32 2131351028, %v974
    %v984 = vshrl.u32 2102212464, %v975
    %v985 = vor.u32 %v983, %v984
    %v986 = vshll.u32 2102212464, %v974
    %v987 = vshrl.u32 920167782, %v975
    %v988 = vor.u32 %v986, %v987
    %v989 = vshll.u32 920167782, %v974
    %v990 = vshrl.u32 1326507024, %v975
    %v991 = vor.u32 %v989, %v990
    %vm992 = vcmp.lt.s32.totalorder %v973, 1
    %vm993 = vcmp.lt.s32.totalorder %v973, 2
    %vm994 = vcmp.lt.s32.totalorder %v973, 3
    %vm995 = vcmp.lt.s32.totalorder %v973, 4
    %v996 = vsel %vm992, %v976, %v979
    %v997 = vsel %vm995, %v985, 2102212464
    %v998 = vsel %vm994, %v982, %v997
    %v999 = vsel %vm993, %v996, %v998
    %v1000 = vsel %vm992, %v979, %v982
    %v1001 = vsel %vm995, %v988, 920167782
    %v1002 = vsel %vm994, %v985, %v1001
    %v1003 = vsel %vm993, %v1000, %v1002
    %v1004 = vsel %vm992, %v982, %v985
    %v1005 = vsel %vm995, %v991, 1326507024
    %v1006 = vsel %vm994, %v988, %v1005
    %v1007 = vsel %vm993, %v1004, %v1006
    %v1008 = vshll.u32 %v968, 8
    %v1009 = vmul.u32.u64.compose %v1008, %v1007
    %v1010 = vextract.low.u32 %v1009
    %v1011 = vextract.high.u32 %v1009
    %v1012 = vmul.u32.u64.compose %v1008, %v1003
    %v1013 = vextract.low.u32 %v1012
    %v1014 = vextract.high.u32 %v1012
    %v1015 = vmul.u32 %v1008, %v999
    %v1016 = vadd.s32 %v1011, %v1013
    %vm1017 = vc.u32 %v1011, %v1013
    %v1018 = vadd.s32 %v1014, 1
    %v1019 = vsel %vm1017, %v1018, %v1014
    %v1020 = vadd.s32 %v1015, %v1019
    %v1021 = vadd.s32 %v1020, 536870912
    %v1022 = vshrl.u32 %v1021, 30
    %v1023 = vshll.u32 %v1022, 30
    %v1024 = vsub.s32 %v1020, %v1023
    %vm1025 = vcmp.lt.s32.totalorder %v1024, 0
    %v1026 = vsub.s32 0, %v1024
    %v1027 = vsel %vm1025, %v1026, %v1024
    %v1028 = vclz %v1027
    %v1029 = vsub.s32 %v1028, 2
    %vm1030 = vcmp.gt.s32.totalorder 0, %v1029
    %v1031 = vsel %vm1030, 0, %v1029
    %v1032 = vsub.s32 32, %v1031
    %v1033 = vshll.u32 %v1024, %v1031
    %v1034 = vshrl.u32 %v1016, %v1032
    %v1035 = vor.u32 %v1033, %v1034
    %v1036 = vsub.s32 4294967266, %v1031
    %v1037 = vadd.s32 %v1036, 127
    %v1038 = vshll.u32 %v1037, 23
    %v1039 = vor.u32 4788187, %v1038
    %v1040 = vand.u32 2147483647, %v1039
    %v1042 = vcvt.s32.f32 %v1035
    %v1043 = vmul.f32 %v1042, %v1040
    %v1044 = vxor.u32 %v1043, 2147483648
    %v1045 = vsel %vm962, %v1044, %v1043
    %v1046 = vsub.s32 4, %v1022
    %v1047 = vsel %vm962, %v1046, %v1022
    %v1048 = vsel %vm961, %v356, %v1045
    %v1049 = vsel %vm961, 0, %v1047
    %v1050 = vcosq.f32.pop %v1048
    %v1051 = vsinq.f32.pop %v1048
    %vm1052 = vweird.f32 %v356
    %v1053 = vadd.s32 %v1049, 3
    %v1054 = vand.u32 %v1053, 3
    %vm1055 = vcmp.lt.s32.totalorder %v1054, 2
    %vm1056 = vcmp.eq.s32.totalorder %v1054, 0
    %v1057 = vxor.u32 %v1051, 2147483648
    %v1058 = vsel %vm1056, %v1050, %v1057
    %vm1059 = vcmp.eq.s32.totalorder %v1054, 2
    %v1060 = vxor.u32 %v1050, 2147483648
    %v1061 = vsel %vm1059, %v1060, %v1051
    %v1062 = vsel %vm1055, %v1058, %v1061
    %v1063 = vsel %vm1052, nan, %v1062
    %v1064 = vand.u32 2147483647, %v358
    %vm1065 = vcmp.le.f32.partialorder %v1064, 0.7853982
    %vm1066 = vcmp.lt.s32.totalorder %v358, 0
    %v1067 = vand.u32 %v358, 2139095040
    %v1068 = vshrl.u32 %v1067, 23
    %v1069 = vsub.s32 %v1068, 127
    %v1070 = vand.u32 2147483647, %v358
    %v1071 = vand.u32 %v1070, 8388607
    %v1072 = vor.u32 %v1071, 8388608
    %v1073 = vsub.s32 0, %v1072
    %v1074 = vadd.s32 %v1069, 1
    %vm1075 = vcmp.gt.s32.totalorder %v1074, 0
    %v1076 = vsel %vm1075, %v1074, 0
    %v1077 = vshrl.u32 %v1076, 5
    %v1078 = vand.u32 %v1076, 31
    %v1079 = vsub.s32 32, %v1078
    %v1080 = vshrl.u32 683565275, %v1079
    %v1081 = vshll.u32 683565275, %v1078
    %v1082 = vshrl.u32 2475754826, %v1079
    %v1083 = vor.u32 %v1081, %v1082
    %v1084 = vshll.u32 2475754826, %v1078
    %v1085 = vshrl.u32 2131351028, %v1079
    %v1086 = vor.u32 %v1084, %v1085
    %v1087 = vshll.u32 2131351028, %v1078
    %v1088 = vshrl.u32 2102212464, %v1079
    %v1089 = vor.u32 %v1087, %v1088
    %v1090 = vshll.u32 2102212464, %v1078
    %v1091 = vshrl.u32 920167782, %v1079
    %v1092 = vor.u32 %v1090, %v1091
    %v1093 = vshll.u32 920167782, %v1078
    %v1094 = vshrl.u32 1326507024, %v1079
    %v1095 = vor.u32 %v1093, %v1094
    %vm1096 = vcmp.lt.s32.totalorder %v1077, 1
    %vm1097 = vcmp.lt.s32.totalorder %v1077, 2
    %vm1098 = vcmp.lt.s32.totalorder %v1077, 3
    %vm1099 = vcmp.lt.s32.totalorder %v1077, 4
    %v1100 = vsel %vm1096, %v1080, %v1083
    %v1101 = vsel %vm1099, %v1089, 2102212464
    %v1102 = vsel %vm1098, %v1086, %v1101
    %v1103 = vsel %vm1097, %v1100, %v1102
    %v1104 = vsel %vm1096, %v1083, %v1086
    %v1105 = vsel %vm1099, %v1092, 920167782
    %v1106 = vsel %vm1098, %v1089, %v1105
    %v1107 = vsel %vm1097, %v1104, %v1106
    %v1108 = vsel %vm1096, %v1086, %v1089
    %v1109 = vsel %vm1099, %v1095, 1326507024
    %v1110 = vsel %vm1098, %v1092, %v1109
    %v1111 = vsel %vm1097, %v1108, %v1110
    %v1112 = vshll.u32 %v1072, 8
    %v1113 = vmul.u32.u64.compose %v1112, %v1111
    %v1114 = vextract.low.u32 %v1113
    %v1115 = vextract.high.u32 %v1113
    %v1116 = vmul.u32.u64.compose %v1112, %v1107
    %v1117 = vextract.low.u32 %v1116
    %v1118 = vextract.high.u32 %v1116
    %v1119 = vmul.u32 %v1112, %v1103
    %v1120 = vadd.s32 %v1115, %v1117
    %vm1121 = vc.u32 %v1115, %v1117
    %v1122 = vadd.s32 %v1118, 1
    %v1123 = vsel %vm1121, %v1122, %v1118
    %v1124 = vadd.s32 %v1119, %v1123
    %v1125 = vadd.s32 %v1124, 536870912
    %v1126 = vshrl.u32 %v1125, 30
    %v1127 = vshll.u32 %v1126, 30
    %v1128 = vsub.s32 %v1124, %v1127
    %vm1129 = vcmp.lt.s32.totalorder %v1128, 0
    %v1130 = vsub.s32 0, %v1128
    %v1131 = vsel %vm1129, %v1130, %v1128
    %v1132 = vclz %v1131
    %v1133 = vsub.s32 %v1132, 2
    %vm1134 = vcmp.gt.s32.totalorder 0, %v1133
    %v1135 = vsel %vm1134, 0, %v1133
    %v1136 = vsub.s32 32, %v1135
    %v1137 = vshll.u32 %v1128, %v1135
    %v1138 = vshrl.u32 %v1120, %v1136
    %v1139 = vor.u32 %v1137, %v1138
    %v1140 = vsub.s32 4294967266, %v1135
    %v1141 = vadd.s32 %v1140, 127
    %v1142 = vshll.u32 %v1141, 23
    %v1143 = vor.u32 4788187, %v1142
    %v1144 = vand.u32 2147483647, %v1143
    %v1146 = vcvt.s32.f32 %v1139
    %v1147 = vmul.f32 %v1146, %v1144
    %v1148 = vxor.u32 %v1147, 2147483648
    %v1149 = vsel %vm1066, %v1148, %v1147
    %v1150 = vsub.s32 4, %v1126
    %v1151 = vsel %vm1066, %v1150, %v1126
    %v1152 = vsel %vm1065, %v358, %v1149
    %v1153 = vsel %vm1065, 0, %v1151
    %v1154 = vcosq.f32.pop %v1152
    %v1155 = vsinq.f32.pop %v1152
    %vm1156 = vweird.f32 %v358
    %v1157 = vadd.s32 %v1153, 3
    %v1158 = vand.u32 %v1157, 3
    %vm1159 = vcmp.lt.s32.totalorder %v1158, 2
    %vm1160 = vcmp.eq.s32.totalorder %v1158, 0
    %v1161 = vxor.u32 %v1155, 2147483648
    %v1162 = vsel %vm1160, %v1154, %v1161
    %vm1163 = vcmp.eq.s32.totalorder %v1158, 2
    %v1164 = vxor.u32 %v1154, 2147483648
    %v1165 = vsel %vm1163, %v1164, %v1155
    %v1166 = vsel %vm1159, %v1162, %v1165
    %v1167 = vsel %vm1156, nan, %v1166
    %v1168 = vand.u32 2147483647, %v427
    %vm1169 = vcmp.le.f32.partialorder %v1168, 0.7853982
    %vm1170 = vcmp.lt.s32.totalorder %v427, 0
    %v1171 = vand.u32 %v427, 2139095040
    %v1172 = vshrl.u32 %v1171, 23
    %v1173 = vsub.s32 %v1172, 127
    %v1174 = vand.u32 2147483647, %v427
    %v1175 = vand.u32 %v1174, 8388607
    %v1176 = vor.u32 %v1175, 8388608
    %v1177 = vsub.s32 0, %v1176
    %v1178 = vadd.s32 %v1173, 1
    %vm1179 = vcmp.gt.s32.totalorder %v1178, 0
    %v1180 = vsel %vm1179, %v1178, 0
    %v1181 = vshrl.u32 %v1180, 5
    %v1182 = vand.u32 %v1180, 31
    %v1183 = vsub.s32 32, %v1182
    %v1184 = vshrl.u32 683565275, %v1183
    %v1185 = vshll.u32 683565275, %v1182
    %v1186 = vshrl.u32 2475754826, %v1183
    %v1187 = vor.u32 %v1185, %v1186
    %v1188 = vshll.u32 2475754826, %v1182
    %v1189 = vshrl.u32 2131351028, %v1183
    %v1190 = vor.u32 %v1188, %v1189
    %v1191 = vshll.u32 2131351028, %v1182
    %v1192 = vshrl.u32 2102212464, %v1183
    %v1193 = vor.u32 %v1191, %v1192
    %v1194 = vshll.u32 2102212464, %v1182
    %v1195 = vshrl.u32 920167782, %v1183
    %v1196 = vor.u32 %v1194, %v1195
    %v1197 = vshll.u32 920167782, %v1182
    %v1198 = vshrl.u32 1326507024, %v1183
    %v1199 = vor.u32 %v1197, %v1198
    %vm1200 = vcmp.lt.s32.totalorder %v1181, 1
    %vm1201 = vcmp.lt.s32.totalorder %v1181, 2
    %vm1202 = vcmp.lt.s32.totalorder %v1181, 3
    %vm1203 = vcmp.lt.s32.totalorder %v1181, 4
    %v1204 = vsel %vm1200, %v1184, %v1187
    %v1205 = vsel %vm1203, %v1193, 2102212464
    %v1206 = vsel %vm1202, %v1190, %v1205
    %v1207 = vsel %vm1201, %v1204, %v1206
    %v1208 = vsel %vm1200, %v1187, %v1190
    %v1209 = vsel %vm1203, %v1196, 920167782
    %v1210 = vsel %vm1202, %v1193, %v1209
    %v1211 = vsel %vm1201, %v1208, %v1210
    %v1212 = vsel %vm1200, %v1190, %v1193
    %v1213 = vsel %vm1203, %v1199, 1326507024
    %v1214 = vsel %vm1202, %v1196, %v1213
    %v1215 = vsel %vm1201, %v1212, %v1214
    %v1216 = vshll.u32 %v1176, 8
    %v1217 = vmul.u32.u64.compose %v1216, %v1215
    %v1218 = vextract.low.u32 %v1217
    %v1219 = vextract.high.u32 %v1217
    %v1220 = vmul.u32.u64.compose %v1216, %v1211
    %v1221 = vextract.low.u32 %v1220
    %v1222 = vextract.high.u32 %v1220
    %v1223 = vmul.u32 %v1216, %v1207
    %v1224 = vadd.s32 %v1219, %v1221
    %vm1225 = vc.u32 %v1219, %v1221
    %v1226 = vadd.s32 %v1222, 1
    %v1227 = vsel %vm1225, %v1226, %v1222
    %v1228 = vadd.s32 %v1223, %v1227
    %v1229 = vadd.s32 %v1228, 536870912
    %v1230 = vshrl.u32 %v1229, 30
    %v1231 = vshll.u32 %v1230, 30
    %v1232 = vsub.s32 %v1228, %v1231
    %vm1233 = vcmp.lt.s32.totalorder %v1232, 0
    %v1234 = vsub.s32 0, %v1232
    %v1235 = vsel %vm1233, %v1234, %v1232
    %v1236 = vclz %v1235
    %v1237 = vsub.s32 %v1236, 2
    %vm1238 = vcmp.gt.s32.totalorder 0, %v1237
    %v1239 = vsel %vm1238, 0, %v1237
    %v1240 = vsub.s32 32, %v1239
    %v1241 = vshll.u32 %v1232, %v1239
    %v1242 = vshrl.u32 %v1224, %v1240
    %v1243 = vor.u32 %v1241, %v1242
    %v1244 = vsub.s32 4294967266, %v1239
    %v1245 = vadd.s32 %v1244, 127
    %v1246 = vshll.u32 %v1245, 23
    %v1247 = vor.u32 4788187, %v1246
    %v1248 = vand.u32 2147483647, %v1247
    %v1250 = vcvt.s32.f32 %v1243
    %v1251 = vmul.f32 %v1250, %v1248
    %v1252 = vxor.u32 %v1251, 2147483648
    %v1253 = vsel %vm1170, %v1252, %v1251
    %v1254 = vsub.s32 4, %v1230
    %v1255 = vsel %vm1170, %v1254, %v1230
    %v1256 = vsel %vm1169, %v427, %v1253
    %v1257 = vsel %vm1169, 0, %v1255
    %v1258 = vcosq.f32.pop %v1256
    %v1259 = vsinq.f32.pop %v1256
    %vm1260 = vweird.f32 %v427
    %v1261 = vadd.s32 %v1257, 3
    %v1262 = vand.u32 %v1261, 3
    %vm1263 = vcmp.lt.s32.totalorder %v1262, 2
    %vm1264 = vcmp.eq.s32.totalorder %v1262, 0
    %v1265 = vxor.u32 %v1259, 2147483648
    %v1266 = vsel %vm1264, %v1258, %v1265
    %vm1267 = vcmp.eq.s32.totalorder %v1262, 2
    %v1268 = vxor.u32 %v1258, 2147483648
    %v1269 = vsel %vm1267, %v1268, %v1259
    %v1270 = vsel %vm1263, %v1266, %v1269
    %v1271 = vsel %vm1260, nan, %v1270
    %v1272 = vand.u32 2147483647, %v429
    %vm1273 = vcmp.le.f32.partialorder %v1272, 0.7853982
    %vm1274 = vcmp.lt.s32.totalorder %v429, 0
    %v1275 = vand.u32 %v429, 2139095040
    %v1276 = vshrl.u32 %v1275, 23
    %v1277 = vsub.s32 %v1276, 127
    %v1278 = vand.u32 2147483647, %v429
    %v1279 = vand.u32 %v1278, 8388607
    %v1280 = vor.u32 %v1279, 8388608
    %v1281 = vsub.s32 0, %v1280
    %v1282 = vadd.s32 %v1277, 1
    %vm1283 = vcmp.gt.s32.totalorder %v1282, 0
    %v1284 = vsel %vm1283, %v1282, 0
    %v1285 = vshrl.u32 %v1284, 5
    %v1286 = vand.u32 %v1284, 31
    %v1287 = vsub.s32 32, %v1286
    %v1288 = vshrl.u32 683565275, %v1287
    %v1289 = vshll.u32 683565275, %v1286
    %v1290 = vshrl.u32 2475754826, %v1287
    %v1291 = vor.u32 %v1289, %v1290
    %v1292 = vshll.u32 2475754826, %v1286
    %v1293 = vshrl.u32 2131351028, %v1287
    %v1294 = vor.u32 %v1292, %v1293
    %v1295 = vshll.u32 2131351028, %v1286
    %v1296 = vshrl.u32 2102212464, %v1287
    %v1297 = vor.u32 %v1295, %v1296
    %v1298 = vshll.u32 2102212464, %v1286
    %v1299 = vshrl.u32 920167782, %v1287
    %v1300 = vor.u32 %v1298, %v1299
    %v1301 = vshll.u32 920167782, %v1286
    %v1302 = vshrl.u32 1326507024, %v1287
    %v1303 = vor.u32 %v1301, %v1302
    %vm1304 = vcmp.lt.s32.totalorder %v1285, 1
    %vm1305 = vcmp.lt.s32.totalorder %v1285, 2
    %vm1306 = vcmp.lt.s32.totalorder %v1285, 3
    %vm1307 = vcmp.lt.s32.totalorder %v1285, 4
    %v1308 = vsel %vm1304, %v1288, %v1291
    %v1309 = vsel %vm1307, %v1297, 2102212464
    %v1310 = vsel %vm1306, %v1294, %v1309
    %v1311 = vsel %vm1305, %v1308, %v1310
    %v1312 = vsel %vm1304, %v1291, %v1294
    %v1313 = vsel %vm1307, %v1300, 920167782
    %v1314 = vsel %vm1306, %v1297, %v1313
    %v1315 = vsel %vm1305, %v1312, %v1314
    %v1316 = vsel %vm1304, %v1294, %v1297
    %v1317 = vsel %vm1307, %v1303, 1326507024
    %v1318 = vsel %vm1306, %v1300, %v1317
    %v1319 = vsel %vm1305, %v1316, %v1318
    %v1320 = vshll.u32 %v1280, 8
    %v1321 = vmul.u32.u64.compose %v1320, %v1319
    %v1322 = vextract.low.u32 %v1321
    %v1323 = vextract.high.u32 %v1321
    %v1324 = vmul.u32.u64.compose %v1320, %v1315
    %v1325 = vextract.low.u32 %v1324
    %v1326 = vextract.high.u32 %v1324
    %v1327 = vmul.u32 %v1320, %v1311
    %v1328 = vadd.s32 %v1323, %v1325
    %vm1329 = vc.u32 %v1323, %v1325
    %v1330 = vadd.s32 %v1326, 1
    %v1331 = vsel %vm1329, %v1330, %v1326
    %v1332 = vadd.s32 %v1327, %v1331
    %v1333 = vadd.s32 %v1332, 536870912
    %v1334 = vshrl.u32 %v1333, 30
    %v1335 = vshll.u32 %v1334, 30
    %v1336 = vsub.s32 %v1332, %v1335
    %vm1337 = vcmp.lt.s32.totalorder %v1336, 0
    %v1338 = vsub.s32 0, %v1336
    %v1339 = vsel %vm1337, %v1338, %v1336
    %v1340 = vclz %v1339
    %v1341 = vsub.s32 %v1340, 2
    %vm1342 = vcmp.gt.s32.totalorder 0, %v1341
    %v1343 = vsel %vm1342, 0, %v1341
    %v1344 = vsub.s32 32, %v1343
    %v1345 = vshll.u32 %v1336, %v1343
    %v1346 = vshrl.u32 %v1328, %v1344
    %v1347 = vor.u32 %v1345, %v1346
    %v1348 = vsub.s32 4294967266, %v1343
    %v1349 = vadd.s32 %v1348, 127
    %v1350 = vshll.u32 %v1349, 23
    %v1351 = vor.u32 4788187, %v1350
    %v1352 = vand.u32 2147483647, %v1351
    %v1354 = vcvt.s32.f32 %v1347
    %v1355 = vmul.f32 %v1354, %v1352
    %v1356 = vxor.u32 %v1355, 2147483648
    %v1357 = vsel %vm1274, %v1356, %v1355
    %v1358 = vsub.s32 4, %v1334
    %v1359 = vsel %vm1274, %v1358, %v1334
    %v1360 = vsel %vm1273, %v429, %v1357
    %v1361 = vsel %vm1273, 0, %v1359
    %v1362 = vcosq.f32.pop %v1360
    %v1363 = vsinq.f32.pop %v1360
    %vm1364 = vweird.f32 %v429
    %v1365 = vadd.s32 %v1361, 3
    %v1366 = vand.u32 %v1365, 3
    %vm1367 = vcmp.lt.s32.totalorder %v1366, 2
    %vm1368 = vcmp.eq.s32.totalorder %v1366, 0
    %v1369 = vxor.u32 %v1363, 2147483648
    %v1370 = vsel %vm1368, %v1362, %v1369
    %vm1371 = vcmp.eq.s32.totalorder %v1366, 2
    %v1372 = vxor.u32 %v1362, 2147483648
    %v1373 = vsel %vm1371, %v1372, %v1363
    %v1374 = vsel %vm1367, %v1370, %v1373
    %v1375 = vsel %vm1364, nan, %v1374
    %v1376 = vsel %vm536, %v214, %v647
    %v1377 = vsel %vm537, %v216, %v751
    %v1378 = vsel %vm538, %v285, %v855
    %v1379 = vsel %vm539, %v287, %v959
    %v1380 = vsel %vm540, %v356, %v1063
    %v1381 = vsel %vm541, %v358, %v1167
    %v1382 = vsel %vm542, %v427, %v1271
    %v1383 = vsel %vm543, %v429, %v1375
    %v1392 = vcombine.low %v1376, %v1377
    %v1393 = vcombine.low %v1378, %v1379
    %v1394 = vcombine.low %v1380, %v1381
    %v1395 = vcombine.low %v1382, %v1383
    %v1397 = vunpack.c.l.s4 1966171168
    %v1398 = vunpack.c.0.s8 %v1397
    %v1399 = vlaneseq
    %v1400 = vshrl.u32 %v1399, 7
    %v1401 = vsub.s32 %v1398, %v1400
    %v1402 = vrot.slane %v1392, %v1401
    %v1404 = vunpack.c.l.s4 1966171168
    %v1405 = vunpack.c.0.s8 %v1404
    %v1406 = vlaneseq
    %v1407 = vshrl.u32 %v1406, 7
    %v1408 = vsub.s32 %v1405, %v1407
    %v1409 = vrot.slane %v1393, %v1408
    %v1411 = vunpack.c.l.s4 1966171168
    %v1412 = vunpack.c.0.s8 %v1411
    %v1413 = vlaneseq
    %v1414 = vshrl.u32 %v1413, 7
    %v1415 = vsub.s32 %v1412, %v1414
    %v1416 = vrot.slane %v1394, %v1415
    %v1418 = vunpack.c.l.s4 1966171168
    %v1419 = vunpack.c.0.s8 %v1418
    %v1420 = vlaneseq
    %v1421 = vshrl.u32 %v1420, 7
    %v1422 = vsub.s32 %v1419, %v1421
    %v1423 = vrot.slane %v1395, %v1422
    %v1424 = vcombine.low %v1402, %v1409
    %v1425 = vcombine.low %v1416, %v1423
    %v1427 = vunpack.c.l.s4 1966171168
    %v1428 = vunpack.c.0.s8 %v1427
    %v1429 = vlaneseq
    %v1430 = vshrl.u32 %v1429, 7
    %v1431 = vsub.s32 %v1428, %v1430
    %v1432 = vrot.slane %v1424, %v1431
    %v1434 = vunpack.c.l.s4 1966171168
    %v1435 = vunpack.c.0.s8 %v1434
    %v1436 = vlaneseq
    %v1437 = vshrl.u32 %v1436, 7
    %v1438 = vsub.s32 %v1435, %v1437
    %v1439 = vrot.slane %v1425, %v1438
    %v1440 = vcombine.low %v1432, %v1439
    %1442 = vst [vmem:[#allocation8] sm:$0xff] %v1440
    // Predicated region
    $region26: #{tpu_custom_call.1} parent=1 // pred_check
      _
    $region27: #{tpu_custom_call.1} parent=1 // pred_check_branch
      %1444 = sbr.rel (0) target = $region29
    $region28: #{tpu_custom_call.1} parent=1 // pred_region
      %s1446 = ssub.s32 128, 128
      %1447 = vsyncadd [#allocation4], %s1446
      %s1449 = sshll.u32 [#allocation8], 4
      %s1450 = int_to_ptr.vmem [resolvable:$true] %s1449
      %1452 = dma.vmem_to_hbm [thread:$0]  %s1450, 128, %s3, [#allocation4]
    $region29: #{tpu_custom_call.1} parent=1 // pred_fallthru
      _
    // Predicated region
    $region30: #{tpu_custom_call.1} parent=1 // pred_check
      _
    $region31: #{tpu_custom_call.1} parent=1 // pred_check_branch
      %1454 = sbr.rel (0) target = $region33
    $region32: #{tpu_custom_call.1} parent=1 // pred_region
      %1455 = dma.done [#allocation4], 128
    $region33: #{tpu_custom_call.1} parent=1 // pred_fallthru
      _
    %1456 = vsyncpa [#allocation3], 1
    %1457 = vsyncpa [#allocation6], 1
    %1458 = vsyncpa [#allocation4], 1

</llo_original>
